<compile_context>
chip_gen: v6e
topology: v6e:2x2x1
jax: 0.10.0
libtpu: 0.0.40
codegen_flags: <defaults>
</compile_context>

<pallas_src>
import jax
import jax.numpy as jnp
from jax.experimental import pallas as pl
from jax.experimental.pallas import tpu as pltpu

EPS = 1e-12  # F.normalize default eps


def _rup(a, b):
    return -(-a // b) * b


def _cdiv(a, b):
    return -(-a // b)


def _nl_fused_kernel(x_ref, wt_ref, o_ref, acc_ref, ss_ref):
    """y = x @ W.T with W per-row L2 norm fused in-kernel (norm_dim_in=True).

    x_ref: (tm, tk), wt_ref: (tk, tn) [tile of W.T], o_ref: (tm, tn),
    acc_ref: (tm, tn) f32 scratch, ss_ref: (1, tn) f32 running sum-of-squares.
    """
    @pl.when(pl.program_id(2) == 0)
    def _():
        acc_ref[...] = jnp.zeros_like(acc_ref)
        ss_ref[...] = jnp.zeros_like(ss_ref)

    wt = wt_ref[...]
    # Plain NN matmul: native-dtype operands feed the MXU, f32 accumulation.
    acc_ref[...] += jnp.dot(x_ref[...], wt, preferred_element_type=jnp.float32)

    # Sum of squares of the weight columns (rows of the original W), in f32.
    wf = wt.astype(jnp.float32)
    ss_ref[...] += jnp.sum(wf * wf, axis=0, keepdims=True)

    @pl.when(pl.program_id(2) == pl.num_programs(2) - 1)
    def _():
        # 1 / max(||w_row||, eps), applied once to the f32 accumulator.
        inv = 1.0 / jnp.maximum(jnp.sqrt(ss_ref[...]), EPS)  # (1, tn) f32
        o_ref[...] = (acc_ref[...] * inv).astype(o_ref.dtype)


def _nl_plain_kernel(x_ref, wt_ref, o_ref, acc_ref):
    """Plain tiled matmul y = x @ Wt (norm already folded into Wt by wrapper)."""
    @pl.when(pl.program_id(2) == 0)
    def _():
        acc_ref[...] = jnp.zeros_like(acc_ref)

    acc_ref[...] += jnp.dot(x_ref[...], wt_ref[...],
                            preferred_element_type=jnp.float32)

    @pl.when(pl.program_id(2) == pl.num_programs(2) - 1)
    def _():
        o_ref[...] = acc_ref[...].astype(o_ref.dtype)


def norm_linear(x, w, *, norm_dim_in=True, tm=512, tn=512, tk=512):
    """NormLinear forward: x (..., dim), w (dim_out, dim) -> (..., dim_out).

    Tile guidance (perf review): 512-square is the floor on all generations;
    use tm=tn=1024 (tk up to 1024) on v6e, ~512-768 on v7x (64 MiB VMEM/TC).
    The scoped-VMEM limit is raised automatically only when tiles need it.
    """
    *lead, dim = x.shape
    dim_out, dim_w = w.shape
    assert dim == dim_w, (dim, dim_w)

    x2d = x.reshape(-1, dim)
    m = x2d.shape[0]

    # One-time transpose of W to (K, N): kernel runs a plain NN matmul.
    wt = jnp.swapaxes(w, 0, 1)  # (dim, dim_out)

    if not norm_dim_in:
        # Per-input-column norm (over dim_out): fold into W once, in f32.
        wf = wt.astype(jnp.float32)
        nrm = jnp.sqrt(jnp.sum(wf * wf, axis=1, keepdims=True))  # (dim, 1)
        wt = (wf / jnp.maximum(nrm, EPS)).astype(w.dtype)

    # dtype-aware sublane packing for the M (second-to-last) axis.
    itemsize = jnp.dtype(x.dtype).itemsize
    row_align = {1: 32, 2: 16}.get(itemsize, 8)

    m_al = _rup(m, row_align)
    n_al = _rup(dim_out, 128)
    k_al = _rup(dim, 128)

    tm_ = min(_rup(tm, row_align), m_al)
    tn_ = min(_rup(tn, 128), n_al)
    tk_ = min(_rup(tk, 128), k_al)

    # Megacore (v7x): if both parallel axes collapse to one tile, halve tm so
    # the grid still has >= 2 parallel tiles for the 2 TensorCores.
    if _cdiv(n_al, tn_) == 1 and _cdiv(m_al, tm_) == 1 and tm_ >= 2 * row_align:
        tm_ = _rup(_cdiv(tm_, 2), row_align)

    m_p = _rup(m, tm_)
    n_p = _rup(dim_out, tn_)
    k_p = _rup(dim, tk_)

    x_p = x2d if (m_p == m and k_p == dim) else jnp.pad(
        x2d, ((0, m_p - m), (0, k_p - dim)))
    wt_p = wt if (k_p == dim and n_p == dim_out) else jnp.pad(
        wt, ((0, k_p - dim), (0, n_p - dim_out)))

    grid = (m_p // tm_, n_p // tn_, k_p // tk_)
    m_tiles, n_tiles, _ = grid

    scratch = [pltpu.VMEM((tm_, tn_), jnp.float32)]
    if norm_dim_in:
        kernel = _nl_fused_kernel
        scratch.append(pltpu.VMEM((1, tn_), jnp.float32))
    else:
        kernel = _nl_plain_kernel

    w_itemsize = jnp.dtype(wt_p.dtype).itemsize
    cost = pl.CostEstimate(
        flops=2 * m_p * n_p * k_p,
        transcendentals=0,
        # Real traffic: x re-read per N-tile, W re-read per M-tile, out once.
        bytes_accessed=(n_tiles * x_p.size * itemsize
                        + m_tiles * wt_p.size * w_itemsize
                        + m_p * n_p * itemsize),
    )

    # Raise the scoped-VMEM limit only when the requested tiles need it
    # (v5e default ~16 MiB); keep well below v7x's 64 MiB physical VMEM/TC.
    vmem_est = (2 * tm_ * tk_ * itemsize        # x, double-buffered
                + 2 * tk_ * tn_ * w_itemsize    # W, double-buffered
                + 2 * tm_ * tn_ * itemsize      # out, double-buffered
                + tm_ * tn_ * 4 + tn_ * 4)      # f32 accumulator + norm scratch
    cp_kwargs = dict(dimension_semantics=("parallel", "parallel", "arbitrary"))
    if vmem_est > 12 * 1024 * 1024:
        cp_kwargs["vmem_limit_bytes"] = int(
            min(vmem_est * 3 // 2 + (1 << 20), 48 * 1024 * 1024))

    out_p = pl.pallas_call(
        kernel,
        out_shape=jax.ShapeDtypeStruct((m_p, n_p), x.dtype),
        grid_spec=pltpu.PrefetchScalarGridSpec(
            num_scalar_prefetch=0,
            grid=grid,
            in_specs=[
                pl.BlockSpec((tm_, tk_), lambda i, j, k: (i, k)),
                pl.BlockSpec((tk_, tn_), lambda i, j, k: (k, j)),
            ],
            out_specs=pl.BlockSpec((tm_, tn_), lambda i, j, k: (i, j)),
            scratch_shapes=scratch,
        ),
        compiler_params=pltpu.CompilerParams(**cp_kwargs),
        cost_estimate=cost,
    )(x_p, wt_p)

    return out_p[:m, :dim_out].reshape(*lead, dim_out)


def _reference(x, w, *, norm_dim_in=True):
    wf = w.astype(jnp.float32)
    axis = -1 if norm_dim_in else 0
    nrm = jnp.sqrt(jnp.sum(wf * wf, axis=axis, keepdims=True))
    w_n = wf / jnp.maximum(nrm, EPS)
    y = jnp.einsum("...k,nk->...n", x.astype(jnp.float32), w_n,
                   precision=jax.lax.Precision.HIGHEST)
    return y.astype(x.dtype)


if __name__ == "__main__":
    key = jax.random.PRNGKey(0)
    k_x, k_w, k_x2, k_w2 = jax.random.split(key, 4)

    # Small shapes implied by the module: x (batch, seq, dim), W (dim_out, dim).
    batch, seq, dim, dim_out = 2, 8, 32, 64
    x = jax.random.normal(k_x, (batch, seq, dim), dtype=jnp.float32)
    w = jax.random.normal(k_w, (dim_out, dim), dtype=jnp.float32) * 0.02

    # Default module config: norm_dim_in=True (fused in-kernel W row norm).
    y = jax.block_until_ready(norm_linear(x, w, norm_dim_in=True))
    assert y.shape == (batch, seq, dim_out)
    assert jnp.allclose(y, _reference(x, w, norm_dim_in=True), atol=1e-4, rtol=1e-4)

    # norm_dim_in=False variant (scale folded into W in the wrapper).
    y2 = jax.block_until_ready(norm_linear(x, w, norm_dim_in=False))
    assert jnp.allclose(y2, _reference(x, w, norm_dim_in=False), atol=1e-4, rtol=1e-4)

    # Larger shape exercising multi-tile M/K accumulation and N/K padding.
    b2, s2, d2, do2 = 2, 48, 1024, 320
    x_big = jax.random.normal(k_x2, (b2, s2, d2), dtype=jnp.float32)
    w_big = jax.random.normal(k_w2, (do2, d2), dtype=jnp.float32) * 0.02
    y3 = jax.block_until_ready(norm_linear(x_big, w_big, norm_dim_in=True))
    assert jnp.allclose(y3, _reference(x_big, w_big, norm_dim_in=True),
                        atol=2e-3, rtol=2e-3)
    y4 = jax.block_until_ready(norm_linear(x_big, w_big, norm_dim_in=False))
    assert jnp.allclose(y4, _reference(x_big, w_big, norm_dim_in=False),
                        atol=2e-3, rtol=2e-3)

    print("KERNEL_OK")
</pallas_src>

<mosaic_0001>
module attributes {stable_mosaic.version = 11 : i64} {
  func.func @_nl_fused_kernel(%arg0: i32, %arg1: i32, %arg2: i32, %arg3: memref<8x128xf32, #tpu.memory_space<vmem>>, %arg4: memref<128x128xf32, #tpu.memory_space<vmem>>, %arg5: memref<8x128xf32, #tpu.memory_space<vmem>>, %arg6: memref<8x128xf32, #tpu.memory_space<vmem>>, %arg7: memref<1x128xf32, #tpu.memory_space<vmem>>) attributes {dimension_semantics = [#tpu.dimension_semantics<parallel>, #tpu.dimension_semantics<parallel>, #tpu.dimension_semantics<arbitrary>], iteration_bounds = array<i64: 2, 1, 1>, scalar_prefetch = 0 : i64, scratch_operands = 2 : i64, tpu.core_type = #tpu.core_type<tc>, window_params = [{transform_indices = @transform_0, window_bounds = array<i64: 8, 128>}, {transform_indices = @transform_1, window_bounds = array<i64: 128, 128>}, {transform_indices = @transform_2, window_bounds = array<i64: 8, 128>}]} {
    %c0_i32 = arith.constant 0 : i32
    %0 = arith.cmpi eq, %arg2, %c0_i32 : i32
    %1 = arith.extui %0 : i1 to i32
    %c0_i32_0 = arith.constant 0 : i32
    %2 = arith.cmpi ne, %1, %c0_i32_0 : i32
    scf.if %2 {
      %cst_15 = arith.constant 0.000000e+00 : f32
      %18 = vector.broadcast %cst_15 : f32 to vector<8x128xf32>
      %c0_16 = arith.constant 0 : index
      %c0_17 = arith.constant 0 : index
      %19 = vector.load %arg6[%c0_16, %c0_17] : memref<8x128xf32, #tpu.memory_space<vmem>>, vector<8x128xf32>
      tpu.vector_store %arg6[%c0_16, %c0_17], %18 {strides = array<i32>} : memref<8x128xf32, #tpu.memory_space<vmem>>, vector<8x128xf32>,
      %cst_18 = arith.constant 0.000000e+00 : f32
      %20 = vector.broadcast %cst_18 : f32 to vector<1x128xf32>
      %c0_19 = arith.constant 0 : index
      %c0_20 = arith.constant 0 : index
      %21 = vector.load %arg7[%c0_19, %c0_20] : memref<1x128xf32, #tpu.memory_space<vmem>>, vector<1x128xf32>
      tpu.vector_store %arg7[%c0_19, %c0_20], %20 {strides = array<i32>} : memref<1x128xf32, #tpu.memory_space<vmem>>, vector<1x128xf32>,
    } else {
    }
    %c0 = arith.constant 0 : index
    %c0_1 = arith.constant 0 : index
    %3 = vector.load %arg4[%c0, %c0_1] : memref<128x128xf32, #tpu.memory_space<vmem>>, vector<128x128xf32>
    %c0_2 = arith.constant 0 : index
    %c0_3 = arith.constant 0 : index
    %4 = vector.load %arg6[%c0_2, %c0_3] : memref<8x128xf32, #tpu.memory_space<vmem>>, vector<8x128xf32>
    %c0_4 = arith.constant 0 : index
    %c0_5 = arith.constant 0 : index
    %5 = vector.load %arg3[%c0_4, %c0_5] : memref<8x128xf32, #tpu.memory_space<vmem>>, vector<8x128xf32>
    %cst = arith.constant dense<0.000000e+00> : vector<8x128xf32>
    %6 = tpu.matmul %5, %3, %cst {dimension_numbers = #tpu.dot_dimension_numbers<[1], [0], [0], [1], [0, 0, 1, 1], [], []>} : vector<8x128xf32>, vector<128x128xf32>, vector<8x128xf32> -> vector<8x128xf32>
    %7 = arith.addf %4, %6 : vector<8x128xf32>
    %c0_6 = arith.constant 0 : index
    %c0_7 = arith.constant 0 : index
    %8 = vector.load %arg6[%c0_6, %c0_7] : memref<8x128xf32, #tpu.memory_space<vmem>>, vector<8x128xf32>
    tpu.vector_store %arg6[%c0_6, %c0_7], %7 {strides = array<i32>} : memref<8x128xf32, #tpu.memory_space<vmem>>, vector<8x128xf32>,
    %c0_8 = arith.constant 0 : index
    %c0_9 = arith.constant 0 : index
    %9 = vector.load %arg7[%c0_8, %c0_9] : memref<1x128xf32, #tpu.memory_space<vmem>>, vector<1x128xf32>
    %10 = arith.mulf %3, %3 : vector<128x128xf32>
    %cst_10 = arith.constant dense<0.000000e+00> : vector<128xf32>
    %11 = vector.multi_reduction <add>, %10, %cst_10 [0] : vector<128x128xf32> to vector<128xf32>
    %12 = vector.shape_cast %11 : vector<128xf32> to vector<1x128xf32>
    %13 = arith.addf %9, %12 : vector<1x128xf32>
    %c0_11 = arith.constant 0 : index
    %c0_12 = arith.constant 0 : index
    %14 = vector.load %arg7[%c0_11, %c0_12] : memref<1x128xf32, #tpu.memory_space<vmem>>, vector<1x128xf32>
    tpu.vector_store %arg7[%c0_11, %c0_12], %13 {strides = array<i32>} : memref<1x128xf32, #tpu.memory_space<vmem>>, vector<1x128xf32>,
    %c0_i32_13 = arith.constant 0 : i32
    %15 = arith.cmpi eq, %arg2, %c0_i32_13 : i32
    %16 = arith.extui %15 : i1 to i32
    %c0_i32_14 = arith.constant 0 : i32
    %17 = arith.cmpi ne, %16, %c0_i32_14 : i32
    scf.if %17 {
      %c0_15 = arith.constant 0 : index
      %c0_16 = arith.constant 0 : index
      %18 = vector.load %arg7[%c0_15, %c0_16] : memref<1x128xf32, #tpu.memory_space<vmem>>, vector<1x128xf32>
      %19 = math.sqrt %18 : vector<1x128xf32>
      %cst_17 = arith.constant 9.99999996E-13 : f32
      %20 = vector.broadcast %cst_17 : f32 to vector<1x128xf32>
      %21 = arith.maximumf %19, %20 : vector<1x128xf32>
      %cst_18 = arith.constant 1.000000e+00 : f32
      %22 = vector.broadcast %cst_18 : f32 to vector<1x128xf32>
      %23 = arith.divf %22, %21 : vector<1x128xf32>
      %c0_19 = arith.constant 0 : index
      %c0_20 = arith.constant 0 : index
      %24 = vector.load %arg6[%c0_19, %c0_20] : memref<8x128xf32, #tpu.memory_space<vmem>>, vector<8x128xf32>
      %25 = vector.broadcast %23 : vector<1x128xf32> to vector<8x128xf32>
      %26 = arith.mulf %24, %25 : vector<8x128xf32>
      %c0_21 = arith.constant 0 : index
      %c0_22 = arith.constant 0 : index
      %27 = vector.load %arg5[%c0_21, %c0_22] : memref<8x128xf32, #tpu.memory_space<vmem>>, vector<8x128xf32>
      tpu.vector_store %arg5[%c0_21, %c0_22], %26 {strides = array<i32>} : memref<8x128xf32, #tpu.memory_space<vmem>>, vector<8x128xf32>,
    } else {
    }
    return
  }
  func.func @transform_0(%arg0: i32, %arg1: i32, %arg2: i32) -> (i32, i32) {
    %c0_i32 = arith.constant 0 : i32
    return %arg0, %arg2 : i32, i32
  }
  func.func @transform_1(%arg0: i32, %arg1: i32, %arg2: i32) -> (i32, i32) {
    %c0_i32 = arith.constant 0 : i32
    return %arg2, %arg1 : i32, i32
  }
  func.func @transform_2(%arg0: i32, %arg1: i32, %arg2: i32) -> (i32, i32) {
    %c0_i32 = arith.constant 0 : i32
    return %arg0, %arg1 : i32, i32
  }
}

</mosaic_0001>

<llo_original>
// kernel: tpu_custom_call.1
$region0: #{tpu_custom_call.1}
  #allocation0 [shape = 'u32[]', space=smem, size = 0x4, offset = 0x4, fixed_abs, tag = 'smem constant byte address 0x4 - core index']
  #allocation1 [shape = 'u32[144,128]{1,0:T(1,128)}', space=vmem, size = 0x12000, scoped, tag = 'internal scratch']
  #allocation2 [shape = 'f32[8,128]{1,0:T(8,128)}', space=vmem, size = 0x1000, scoped, tag = 'scratch operand']
  #allocation3 [shape = 'f32[1,128]{1,0:T(1,128)}', space=vmem, size = 0x200, scoped, tag = 'scratch operand']
  %s0 = inlined_call_operand.hbm [shape: f32[16,128], index: 0, kind: input, shape index: {}]
  %s1 = inlined_call_operand.hbm [shape: f32[128,128], index: 1, kind: input, shape index: {}]
  %s2 = inlined_call_operand.hbm [shape: f32[16,128], index: 2, kind: output, shape index: {}]
  %s3 = sld [smem:[#allocation0]]
  $region57: #{tpu_custom_call.1} parent=0
    _
  %s5 = ssub.s32 1, %s3
  %s6 = scalar_select 0, %s5, %s3
  $region1: #{tpu_custom_call.1} parent=0
    #allocation4 [shape = 'u8[8192]{0}', space=vmem, size = 0x2000, scoped, tag = 'input window, operand 0']
    #allocation5 [shape = 's32[2]{0}', space=sflag, size = 0x8, scoped, tag = 'scoped memory for tpu_custom_call.1']
    #allocation6 [shape = 's32[2]{0}', space=sflag, size = 0x8, scoped, tag = 'scoped memory for tpu_custom_call.1']
    #allocation7 [shape = 'u8[65536]{0}', space=vmem, size = 0x10000, scoped, tag = 'input window, operand 1, single buffered']
    #allocation8 [shape = 's32[1]{0}', space=sflag, size = 0x4, scoped, tag = 'scoped memory for tpu_custom_call.1']
    #allocation9 [shape = 'u8[8192]{0}', space=vmem, size = 0x2000, scoped, tag = 'output window, operand 0']
    %7 = vsyncpa [#allocation5], 0
    %s8 = scalar_lea.sflag [#allocation5], 1
    %9 = vsyncpa %s8, 0
    %10 = vsyncpa [#allocation8], 0
    %11 = vsyncpa [#allocation6], 0
    %s12 = scalar_lea.sflag [#allocation6], 1
    %13 = vsyncpa %s12, 0
    loop: start=0, step=1, limit=4
    $region2: #{tpu_custom_call.1} parent=1 // loop_pre_header
      _
    $region3: #{tpu_custom_call.1} parent=1 // loop_header
      %s15 = sphi 0, %s19
      %p16 = scmp.ge.s32.totalorder %s15, 4
      %s22 = sphi 0, %s41
      %s23 = sphi 0, %s37
      %s24 = sphi 0, %s33
      %s25 = sphi 0, %s22
      %s26 = sphi 0, %s23
      %s27 = sphi 0, %s24
      %s28 = sphi 0, %s25
      %s29 = sphi 0, %s26
      %s30 = sphi 0, %s27
      %s46 = sphi 0, %s48
      %s49 = sphi 0, %s46
      %s50 = sphi 0, %s49
      %s66 = sphi 0, %s50
      %s74 = sphi 0, %s76
      %s77 = sphi 0, %s74
      %s78 = sphi 0, %s77
      %s94 = sphi 0, %s78
      %s102 = sphi 0, %s104
      %s105 = sphi 0, %s102
      %s106 = sphi 0, %s105
      %s122 = sphi 0, %s106
    $region4: #{tpu_custom_call.1} parent=1 // loop_header_branch
      %18 = sbr.rel (%p16) target = $region8
    $region5: #{tpu_custom_call.1} parent=1 // loop_body
      %s20 = ssub.s32 %s15, 1
      %s21 = ssub.s32 %s15, 2
      %s31 = sadd.s32 1, %s24
      %p32 = scmp.ge.s32.totalorder %s31, 1
      %s33 = scalar_select %p32, 0, %s31
      %s34 = sadd.s32 1, %s23
      %s35 = scalar_select %p32, %s34, %s23
      %p36 = scmp.ge.s32.totalorder %s35, 1
      %s37 = scalar_select %p36, 0, %s35
      %s38 = sadd.s32 1, %s22
      %s39 = scalar_select %p36, %s38, %s22
      %p40 = scmp.ge.s32.totalorder %s39, 2
      %s41 = scalar_select %p40, 0, %s39
      %s42 = ssub.s32 %s22, %s41
      %s43 = ssub.s32 %s24, %s33
      %s44 = sor.u32 %s42, %s43
      %p45 = scmp.eq.s32.totalorder %s44, 0
      %s47 = sadd.s32 %s46, 1
      %s48 = scalar_select %p45, %s46, %s47
      %p51 = pneg %p45
      %p52 = scmp.eq.s32.totalorder %s15, 1
      %p53 = por %p51, %p52
      %p54 = scmp.ne.s32.totalorder %s46, %s49
      %p55 = scmp.eq.s32.totalorder %s15, 0
      %p56 = por %p54, %p55
      %p57 = scmp.ne.s32.totalorder %s46, %s49
      %p58 = scmp.eq.s32.totalorder %s20, 1
      %p59 = por %p57, %p58
      %p60 = scmp.ne.s32.totalorder %s49, %s50
      %p61 = scmp.eq.s32.totalorder %s20, 0
      %p62 = por %p60, %p61
      %p63 = scmp.ne.s32.totalorder %s49, %s50
      %p64 = scmp.eq.s32.totalorder %s21, 1
      %p65 = por %p63, %p64
      %p67 = scmp.ne.s32.totalorder %s50, %s66
      %p68 = scmp.eq.s32.totalorder %s21, 0
      %p69 = por %p67, %p68
      %s70 = ssub.s32 %s24, %s33
      %s71 = ssub.s32 %s23, %s37
      %s72 = sor.u32 %s70, %s71
      %p73 = scmp.eq.s32.totalorder %s72, 0
      %s75 = sadd.s32 %s74, 1
      %s76 = scalar_select %p73, %s74, %s75
      %p79 = pneg %p73
      %p80 = scmp.eq.s32.totalorder %s15, 1
      %p81 = por %p79, %p80
      %p82 = scmp.ne.s32.totalorder %s74, %s77
      %p83 = scmp.eq.s32.totalorder %s15, 0
      %p84 = por %p82, %p83
      %p85 = scmp.ne.s32.totalorder %s74, %s77
      %p86 = scmp.eq.s32.totalorder %s20, 1
      %p87 = por %p85, %p86
      %p88 = scmp.ne.s32.totalorder %s77, %s78
      %p89 = scmp.eq.s32.totalorder %s20, 0
      %p90 = por %p88, %p89
      %p91 = scmp.ne.s32.totalorder %s77, %s78
      %p92 = scmp.eq.s32.totalorder %s21, 1
      %p93 = por %p91, %p92
      %p95 = scmp.ne.s32.totalorder %s78, %s94
      %p96 = scmp.eq.s32.totalorder %s21, 0
      %p97 = por %p95, %p96
      %s98 = ssub.s32 %s22, %s41
      %s99 = ssub.s32 %s23, %s37
      %s100 = sor.u32 %s98, %s99
      %p101 = scmp.eq.s32.totalorder %s100, 0
      %s103 = sadd.s32 %s102, 1
      %s104 = scalar_select %p101, %s102, %s103
      %p107 = pneg %p101
      %p108 = scmp.eq.s32.totalorder %s15, 1
      %p109 = por %p107, %p108
      %p110 = scmp.ne.s32.totalorder %s102, %s105
      %p111 = scmp.eq.s32.totalorder %s15, 0
      %p112 = por %p110, %p111
      %p113 = scmp.ne.s32.totalorder %s102, %s105
      %p114 = scmp.eq.s32.totalorder %s20, 1
      %p115 = por %p113, %p114
      %p116 = scmp.ne.s32.totalorder %s105, %s106
      %p117 = scmp.eq.s32.totalorder %s20, 0
      %p118 = por %p116, %p117
      %p119 = scmp.ne.s32.totalorder %s105, %s106
      %p120 = scmp.eq.s32.totalorder %s21, 1
      %p121 = por %p119, %p120
      %p123 = scmp.ne.s32.totalorder %s106, %s122
      %p124 = scmp.eq.s32.totalorder %s21, 0
      %p125 = por %p123, %p124
      %p126 = scmp.le.s32.totalorder 1, %s15
      %p127 = scmp.lt.s32.totalorder %s15, 3
      %p128 = pnand %p126, %p127
      %p129 = pneg %p128
      // Predicated region
      $region9: #{tpu_custom_call.1} parent=5 // pred_check
        _
      $region10: #{tpu_custom_call.1} parent=5 // pred_check_branch
        %131 = sbr.rel (%p128) target = $region12
      $region11: #{tpu_custom_call.1} parent=5 // pred_region
        %s132 = ssub.s32 %s15, 1
        // Predicated region
        $region13: #{tpu_custom_call.1} parent=11 // pred_check
          %p133 = pneg %p90
        $region14: #{tpu_custom_call.1} parent=11 // pred_check_branch
          %135 = sbr.rel (%p133) target = $region16
        $region15: #{tpu_custom_call.1} parent=11 // pred_region
          %s136 = smul.u32 16, %s27
          %s138 = ssub.s32 2048, 2048
          %139 = vsyncadd [#allocation8], %s138
          %s140 = sadd.s32 %s26, %s136
          %s141 = smul.addr %s140, 128
          %s142 = scalar_lea.hbm %s1, %s141
          %s143 = sshll.u32 [#allocation7], 4
          %s144 = int_to_ptr.vmem [resolvable:$true] %s143
          %149 = dma.hbm_to_vmem [thread:$0]  %s142, 2048, %s144, [#allocation8], 128, 128, 8
        $region16: #{tpu_custom_call.1} parent=11 // pred_fallthru
          _
      $region12: #{tpu_custom_call.1} parent=5 // pred_fallthru
        _
      %p150 = scmp.lt.s32.totalorder %s15, 2
      // Predicated region
      $region17: #{tpu_custom_call.1} parent=5 // pred_check
        %p151 = pneg %p150
      $region18: #{tpu_custom_call.1} parent=5 // pred_check_branch
        %153 = sbr.rel (%p151) target = $region20
      $region19: #{tpu_custom_call.1} parent=5 // pred_region
        // Predicated region
        $region21: #{tpu_custom_call.1} parent=19 // pred_check
          %p154 = pneg %p56
        $region22: #{tpu_custom_call.1} parent=19 // pred_check_branch
          %156 = sbr.rel (%p154) target = $region24
        $region23: #{tpu_custom_call.1} parent=19 // pred_region
          %s157 = sand.u32 %s46, 1
          %s158 = scalar_lea.sflag [#allocation5], %s157
          %s159 = sand.u32 %s46, 1
          %s160 = smul.addr %s159, 8
          %s161 = scalar_lea.vmem [#allocation4], %s160
          %s163 = ssub.s32 128, 128
          %164 = vsyncadd %s158, %s163
          %s165 = sadd.s32 %s24, %s22
          %s166 = smul.addr %s165, 128
          %s167 = scalar_lea.hbm %s0, %s166
          %s169 = sshll.u32 %s161, 4
          %s170 = int_to_ptr.vmem [resolvable:$true] %s169
          %172 = dma.hbm_to_vmem [thread:$0]  %s167, 128, %s170, %s158
        $region24: #{tpu_custom_call.1} parent=19 // pred_fallthru
          _
      $region20: #{tpu_custom_call.1} parent=5 // pred_fallthru
        _
      %p173 = scmp.le.s32.totalorder 1, %s15
      %p174 = scmp.lt.s32.totalorder %s15, 3
      %p175 = pnand %p173, %p174
      %p176 = pneg %p175
      // Predicated region
      $region25: #{tpu_custom_call.1} parent=5 // pred_check
        _
      $region26: #{tpu_custom_call.1} parent=5 // pred_check_branch
        %178 = sbr.rel (%p175) target = $region28
      $region27: #{tpu_custom_call.1} parent=5 // pred_region
        %s179 = ssub.s32 %s15, 1
        %s180 = sand.u32 %s49, 1
        %s181 = scalar_lea.sflag [#allocation5], %s180
        %s182 = sand.u32 %s49, 1
        %s183 = smul.addr %s182, 8
        %s184 = scalar_lea.vmem [#allocation4], %s183
        // Predicated region
        $region29: #{tpu_custom_call.1} parent=27 // pred_check
          %p185 = pneg %p62
        $region30: #{tpu_custom_call.1} parent=27 // pred_check_branch
          %187 = sbr.rel (%p185) target = $region32
        $region31: #{tpu_custom_call.1} parent=27 // pred_region
          %188 = dma.done %s181, 128
        $region32: #{tpu_custom_call.1} parent=27 // pred_fallthru
          _
        // Predicated region
        $region33: #{tpu_custom_call.1} parent=27 // pred_check
          %p189 = pneg %p90
        $region34: #{tpu_custom_call.1} parent=27 // pred_check_branch
          %191 = sbr.rel (%p189) target = $region36
        $region35: #{tpu_custom_call.1} parent=27 // pred_region
          %192 = dma.done [#allocation8], 2048
        $region36: #{tpu_custom_call.1} parent=27 // pred_fallthru
          _
        %s193 = sand.u32 %s49, 1
        %s194 = scalar_lea.sflag [#allocation5], %s193
        %s195 = sand.u32 %s49, 1
        %s196 = smul.addr %s195, 8
        %s197 = scalar_lea.vmem [#allocation4], %s196
        %p198 = pneg %p62
        %p199 = pneg %p59
        %p200 = pneg %p90
        %p201 = pneg %p87
        %p202 = pneg %p118
        %p203 = pneg %p115
        %s204 = sand.u32 %s105, 1
        %s205 = scalar_lea.sflag [#allocation6], %s204
        %s206 = sand.u32 %s105, 1
        %s207 = smul.addr %s206, 8
        %s208 = scalar_lea.vmem [#allocation9], %s207
        %s209 = smul.u32 16, %s27
        %p210 = scmp.eq.s32.totalorder %s27, 0
        // Predicated region
        $region37: #{tpu_custom_call.1} parent=27 // pred_check
          %p211 = pneg %p210
        $region38: #{tpu_custom_call.1} parent=27 // pred_check_branch
          %213 = sbr.rel (%p211) target = $region40
        $region39: #{tpu_custom_call.1} parent=27 // pred_region
          %214 = vst [vmem:[#allocation2] sm:$0xff] 0.0
          %215 = vst [vmem:[#allocation3] sm:$0x1] 0.0
        $region40: #{tpu_custom_call.1} parent=27 // pred_fallthru
          _
        %v216 = vld [vmem:[#allocation7] sm:$0xff]
        %v217 = vld [vmem:[#allocation7 + $0x8] sm:$0xff]
        %v218 = vld [vmem:[#allocation7 + $0x10] sm:$0xff]
        %v219 = vld [vmem:[#allocation7 + $0x18] sm:$0xff]
        %v220 = vld [vmem:[#allocation7 + $0x20] sm:$0xff]
        %v221 = vld [vmem:[#allocation7 + $0x28] sm:$0xff]
        %v222 = vld [vmem:[#allocation7 + $0x30] sm:$0xff]
        %v223 = vld [vmem:[#allocation7 + $0x38] sm:$0xff]
        %v224 = vld [vmem:[#allocation7 + $0x40] sm:$0xff]
        %v225 = vld [vmem:[#allocation7 + $0x48] sm:$0xff]
        %v226 = vld [vmem:[#allocation7 + $0x50] sm:$0xff]
        %v227 = vld [vmem:[#allocation7 + $0x58] sm:$0xff]
        %v228 = vld [vmem:[#allocation7 + $0x60] sm:$0xff]
        %v229 = vld [vmem:[#allocation7 + $0x68] sm:$0xff]
        %v230 = vld [vmem:[#allocation7 + $0x70] sm:$0xff]
        %v231 = vld [vmem:[#allocation7 + $0x78] sm:$0xff]
        %v232 = vld [vmem:[#allocation2] sm:$0xff]
        %v233 = vld [vmem:[%s184] sm:$0xff]
        %234 = vmatprep.subr.mxu0 0.0
        %235 = vmatpush1.msra.mxu0 %v231
        %236 = vmatprep.subr.mxu0 0.0
        %237 = vmatpush1.msra.mxu0 %v230
        %238 = vmatprep.subr.mxu0 0.0
        %239 = vmatpush1.msra.mxu0 %v229
        %240 = vmatprep.subr.mxu0 0.0
        %241 = vmatpush1.msra.mxu0 %v228
        %242 = vmatprep.subr.mxu0 0.0
        %243 = vmatpush1.msra.mxu0 %v227
        %244 = vmatprep.subr.mxu0 0.0
        %245 = vmatpush1.msra.mxu0 %v226
        %246 = vmatprep.subr.mxu0 0.0
        %247 = vmatpush1.msra.mxu0 %v225
        %248 = vmatprep.subr.mxu0 0.0
        %249 = vmatpush1.msra.mxu0 %v224
        %250 = vmatprep.subr.mxu0 0.0
        %251 = vmatpush1.msra.mxu0 %v223
        %252 = vmatprep.subr.mxu0 0.0
        %253 = vmatpush1.msra.mxu0 %v222
        %254 = vmatprep.subr.mxu0 0.0
        %255 = vmatpush1.msra.mxu0 %v221
        %256 = vmatprep.subr.mxu0 0.0
        %257 = vmatpush1.msra.mxu0 %v220
        %258 = vmatprep.subr.mxu0 0.0
        %259 = vmatpush1.msra.mxu0 %v219
        %260 = vmatprep.subr.mxu0 0.0
        %261 = vmatpush1.msra.mxu0 %v218
        %262 = vmatprep.subr.mxu0 0.0
        %263 = vmatpush1.msra.mxu0 %v217
        %264 = vmatprep.subr.mxu0 0.0
        %265 = vmatpush1.msra.mxu0 %v216
        %266 = vmatprep.subr.mxu0 0.0
        %267 = vmatpush2.msra.mxu0 0.0
        %268 = vmatprep.subr.mxu0 0.0
        %269 = vmatpush2.msra.mxu0 0.0
        %270 = vmatprep.subr.mxu0 0.0
        %271 = vmatpush2.msra.mxu0 0.0
        %272 = vmatprep.subr.mxu0 0.0
        %273 = vmatpush2.msra.mxu0 0.0
        %274 = vmatprep.subr.mxu0 0.0
        %275 = vmatpush2.msra.mxu0 0.0
        %276 = vmatprep.subr.mxu0 0.0
        %277 = vmatpush2.msra.mxu0 0.0
        %278 = vmatprep.subr.mxu0 0.0
        %279 = vmatpush2.msra.mxu0 0.0
        %280 = vmatprep.subr.mxu0 0.0
        %281 = vmatpush2.msra.mxu0 0.0
        %282 = vmatprep.subr.mxu0 0.0
        %283 = vmatpush2.msra.mxu0 0.0
        %284 = vmatprep.subr.mxu0 0.0
        %285 = vmatpush2.msra.mxu0 0.0
        %286 = vmatprep.subr.mxu0 0.0
        %287 = vmatpush2.msra.mxu0 0.0
        %288 = vmatprep.subr.mxu0 0.0
        %289 = vmatpush2.msra.mxu0 0.0
        %290 = vmatprep.subr.mxu0 0.0
        %291 = vmatpush2.msra.mxu0 0.0
        %292 = vmatprep.subr.mxu0 0.0
        %293 = vmatpush2.msra.mxu0 0.0
        %294 = vmatprep.subr.mxu0 0.0
        %295 = vmatpush2.msra.mxu0 0.0
        %296 = vmatprep.subr.mxu0 0.0
        %297 = vmatpush2.msra.mxu0 0.0
        %298 = vmatprep.mubr.f32.mxu0 0.0
        %299 = vmatmul.mubr.f32.gmra.mxu0 %v233
        %v300 = vpop.f32.mrf.mxu0
        %v301 = vadd.f32 0.0, %v300
        %v302 = vpop.f32.mrf.mxu0
        %303 = vdwg.mxu0
        %v304 = vadd.f32 %v232, %v301
        %305 = vst [vmem:[#allocation2] sm:$0xff] %v304
        %v306 = vld [vmem:[#allocation3] sm:$0x1]
        %v307 = vmul.f32 %v216, %v216
        %v308 = vmul.f32 %v217, %v217
        %v309 = vmul.f32 %v218, %v218
        %v310 = vmul.f32 %v219, %v219
        %v311 = vmul.f32 %v220, %v220
        %v312 = vmul.f32 %v221, %v221
        %v313 = vmul.f32 %v222, %v222
        %v314 = vmul.f32 %v223, %v223
        %v315 = vmul.f32 %v224, %v224
        %v316 = vmul.f32 %v225, %v225
        %v317 = vmul.f32 %v226, %v226
        %v318 = vmul.f32 %v227, %v227
        %v319 = vmul.f32 %v228, %v228
        %v320 = vmul.f32 %v229, %v229
        %v321 = vmul.f32 %v230, %v230
        %v322 = vmul.f32 %v231, %v231
        %v323 = vadd.f32 %v307, %v308
        %v324 = vadd.f32 %v323, %v309
        %v325 = vadd.f32 %v324, %v310
        %v326 = vadd.f32 %v325, %v311
        %v327 = vadd.f32 %v326, %v312
        %v328 = vadd.f32 %v327, %v313
        %v329 = vadd.f32 %v328, %v314
        %v330 = vadd.f32 %v329, %v315
        %v331 = vadd.f32 %v330, %v316
        %v332 = vadd.f32 %v331, %v317
        %v333 = vadd.f32 %v332, %v318
        %v334 = vadd.f32 %v333, %v319
        %v335 = vadd.f32 %v334, %v320
        %v336 = vadd.f32 %v335, %v321
        %v337 = vadd.f32 %v336, %v322
        %v338 = vrot.slane %v337, 4
        %v339 = vadd.f32 %v337, %v338
        %v340 = vrot.slane %v339, 2
        %v341 = vadd.f32 %v339, %v340
        %v342 = vrot.slane %v341, 1
        %v343 = vadd.f32 %v341, %v342
        %v344 = vadd.f32 %v306, %v343
        %345 = vst [vmem:[#allocation3] sm:$0x1] %v344
        // Predicated region
        $region41: #{tpu_custom_call.1} parent=27 // pred_check
          %p346 = pneg %p210
        $region42: #{tpu_custom_call.1} parent=27 // pred_check_branch
          %348 = sbr.rel (%p346) target = $region44
        $region43: #{tpu_custom_call.1} parent=27 // pred_region
          %v349 = vld [vmem:[#allocation3] sm:$0x1]
          %v350 = vrsqrt.pop %v349
          %v351 = vmul.f32 %v349, %v350
          %vm352 = vcmp.eq.f32.partialorder %v349, inf
          %v353 = vsel %vm352, %v349, %v351
          %vm354 = vcmp.eq.f32.partialorder %v349, 0.0
          %v355 = vand.u32 %v349, 2147483648
          %v356 = vsel %vm354, %v355, %v353
          %v357 = vmax.f32 %v356, 1e-12
          %v358 = vrcp.pop %v357
          %v359 = vmul.f32 1.0, %v358
          %v360 = vld [vmem:[#allocation2] sm:$0xff]
          %v362 = vlaneseq
          %v363 = vshrl.u32 %v362, 7
          %v364 = vsub.s32 0, %v363
          %v365 = vrot.slane %v359, %v364
          %v367 = vmul.f32 %v360, %v365
          %368 = vst [vmem:[%s208] sm:$0xff] %v367
        $region44: #{tpu_custom_call.1} parent=27 // pred_fallthru
          _
        %s369 = sand.u32 %s105, 1
        %s370 = scalar_lea.sflag [#allocation6], %s369
        %s371 = sand.u32 %s105, 1
        %s372 = smul.addr %s371, 8
        %s373 = scalar_lea.vmem [#allocation9], %s372
        // Predicated region
        $region45: #{tpu_custom_call.1} parent=27 // pred_check
          %p374 = pneg %p115
        $region46: #{tpu_custom_call.1} parent=27 // pred_check_branch
          %376 = sbr.rel (%p374) target = $region48
        $region47: #{tpu_custom_call.1} parent=27 // pred_region
          %s378 = ssub.s32 128, 128
          %379 = vsyncadd %s370, %s378
          %s380 = sadd.s32 %s26, %s25
          %s381 = smul.addr %s380, 128
          %s382 = scalar_lea.hbm %s2, %s381
          %s384 = sshll.u32 %s373, 4
          %s385 = int_to_ptr.vmem [resolvable:$true] %s384
          %387 = dma.vmem_to_hbm [thread:$0]  %s385, 128, %s382, %s370
        $region48: #{tpu_custom_call.1} parent=27 // pred_fallthru
          _
      $region28: #{tpu_custom_call.1} parent=5 // pred_fallthru
        _
      %p388 = scmp.le.s32.totalorder 2, %s15
      // Predicated region
      $region49: #{tpu_custom_call.1} parent=5 // pred_check
        %p389 = pneg %p388
      $region50: #{tpu_custom_call.1} parent=5 // pred_check_branch
        %391 = sbr.rel (%p389) target = $region52
      $region51: #{tpu_custom_call.1} parent=5 // pred_region
        %s392 = ssub.s32 %s15, 2
        // Predicated region
        $region53: #{tpu_custom_call.1} parent=51 // pred_check
          %p393 = pneg %p121
        $region54: #{tpu_custom_call.1} parent=51 // pred_check_branch
          %395 = sbr.rel (%p393) target = $region56
        $region55: #{tpu_custom_call.1} parent=51 // pred_region
          %s396 = sand.u32 %s106, 1
          %s397 = scalar_lea.sflag [#allocation6], %s396
          %s398 = sand.u32 %s106, 1
          %s399 = smul.addr %s398, 8
          %s400 = scalar_lea.vmem [#allocation9], %s399
          %401 = dma.done %s397, 128
        $region56: #{tpu_custom_call.1} parent=51 // pred_fallthru
          _
      $region52: #{tpu_custom_call.1} parent=5 // pred_fallthru
        _
    $region6: #{tpu_custom_call.1} parent=1 // loop_footer
      %s19 = sadd.s32 1, %s15
    $region7: #{tpu_custom_call.1} parent=1 // loop_footer_branch
      %14 = sbr.rel target = $region3
    $region8: #{tpu_custom_call.1} parent=1 // loop_exit
      _
    %402 = vsyncpa [#allocation5], 1
    %s403 = scalar_lea.sflag [#allocation5], 1
    %404 = vsyncpa %s403, 1
    %405 = vsyncpa [#allocation8], 1
    %406 = vsyncpa [#allocation6], 1
    %s407 = scalar_lea.sflag [#allocation6], 1
    %408 = vsyncpa %s407, 1

</llo_original>
